<compile_context>
chip_gen: v6e
topology: v6e:2x2x1
jax: 0.10.0
libtpu: 0.0.40
codegen_flags: <defaults>
</compile_context>

<pallas_src>
import numpy as np
import jax
import jax.numpy as jnp
from jax import lax
from jax.experimental import pallas as pl
from jax.experimental.pallas import tpu as pltpu

KERNEL_SIZE = 31
STD = 3.0
CHANNELS = 3  # Conv2d(3, 3, ..., groups=3)


# ----------------------------------------------------------------------------
# Parameter setup (deterministic, mirrors Blurkernel.weights_init 'gaussian')
# ----------------------------------------------------------------------------
def gaussian_kernel_1d(kernel_size: int, std: float) -> np.ndarray:
    """1-D factor of scipy.ndimage.gaussian_filter's impulse response
    (truncate=4.0), clipped to `kernel_size` taps. k2d = outer(k1d, k1d)."""
    radius = int(4.0 * std + 0.5)
    x = np.arange(-radius, radius + 1, dtype=np.float64)
    phi = np.exp(-0.5 * (x / std) ** 2)
    phi = phi / phi.sum()
    k1d = np.zeros(kernel_size, dtype=np.float64)
    center = kernel_size // 2
    for i, v in enumerate(phi):
        idx = center - radius + i
        if 0 <= idx < kernel_size:
            k1d[idx] += v
    return k1d


def _reflect(q: int, size: int) -> int:
    """torch ReflectionPad2d / np.pad(mode='reflect') index mapping."""
    if q < 0:
        return -q
    if q >= size:
        return 2 * (size - 1) - q
    return q


def build_fold_operator(size: int, k1d: np.ndarray) -> np.ndarray:
    """Op[i, s] = sum_{u : reflect(i + u - pad) == s} k1d[u].
    Folds the 1-D Gaussian cross-correlation AND the reflection pad into a
    single (size, size) operator: rows -> A_op = Op(H); cols -> B_op = Op(W).T
    so that out = A_op @ x @ B_op."""
    K = len(k1d)
    pad = K // 2
    assert pad < size, "ReflectionPad2d requires kernel_size // 2 < spatial dim"
    op = np.zeros((size, size), dtype=np.float64)
    for i in range(size):
        for u in range(K):
            op[i, _reflect(i + u - pad, size)] += k1d[u]
    return op


def build_fused_operator(H: int, W: int, k1d: np.ndarray) -> np.ndarray:
    """Fused (H*W, H*W) operator M such that, with row-major flattening,
    vec(out) = vec(x) @ M  ==  vec(A_op @ x @ B_op).
    Derivation: M[h*W+w, i*W+j] = A_op[i,h] * B_op[w,j] = kron(A_op.T, B_op)."""
    a_op = build_fold_operator(H, k1d)          # (H, H) row operator
    b_op = build_fold_operator(W, k1d).T        # (W, W) column operator
    big_op = np.kron(a_op.T, b_op)              # (H*W, H*W)
    return big_op.astype(np.float32)


# ----------------------------------------------------------------------------
# Pallas kernel: whole forward pass = one lane-dense MXU matmul.
# ----------------------------------------------------------------------------
def blur_kernel(x_ref, op_ref, o_ref):
    # x_ref : (N*C, H*W) raw flattened image planes
    # op_ref: (H*W, H*W) fused reflection-pad + Gaussian-blur operator
    # o_ref : (N*C, H*W)
    o_ref[...] = jnp.dot(
        x_ref[...], op_ref[...],
        preferred_element_type=jnp.float32,
    ).astype(o_ref.dtype)


def blur_forward(x: jax.Array, big_op: jax.Array) -> jax.Array:
    """x: (N, C, H, W) float32; big_op: (H*W, H*W) float32."""
    N, C, H, W = x.shape
    x2d = x.reshape(N * C, H * W)  # lane-dense slab (layout plumbing only)
    out2d = pl.pallas_call(
        blur_kernel,
        out_shape=jax.ShapeDtypeStruct((N * C, H * W), x.dtype),
        # Single grid step: whole problem (6 KiB activations + 256 KiB
        # operator) lives in VMEM at once on every TPU generation.
        in_specs=[
            pl.BlockSpec(memory_space=pltpu.MemorySpace.VMEM),
            pl.BlockSpec(memory_space=pltpu.MemorySpace.VMEM),
        ],
        out_specs=pl.BlockSpec(memory_space=pltpu.MemorySpace.VMEM),
    )(x2d, big_op)
    return out2d.reshape(N, C, H, W)


# ----------------------------------------------------------------------------
# Pure-JAX reference (for verification)
# ----------------------------------------------------------------------------
def reference_blur(x: jax.Array, k2d: jax.Array) -> jax.Array:
    C = x.shape[1]
    K = k2d.shape[0]
    pad = K // 2
    xp = jnp.pad(x, ((0, 0), (0, 0), (pad, pad), (pad, pad)), mode="reflect")
    w = jnp.broadcast_to(k2d, (C, K, K))[:, None, :, :]  # (C,1,K,K) OIHW
    return lax.conv_general_dilated(
        xp, w, window_strides=(1, 1), padding="VALID",
        dimension_numbers=("NCHW", "OIHW", "NCHW"),
        feature_group_count=C, precision=lax.Precision.HIGHEST)


if __name__ == "__main__":
    N, C, H, W = 2, CHANNELS, 16, 16  # pad = 15 < 16, valid for reflection pad
    key = jax.random.PRNGKey(0)
    x = jax.random.normal(key, (N, C, H, W), dtype=jnp.float32)

    # weights_init('gaussian'): separable Gaussian; fold pad + both 1-D passes
    # into one dense (H*W, H*W) operator on the host.
    k1d = gaussian_kernel_1d(KERNEL_SIZE, STD)
    big_op = jnp.asarray(build_fused_operator(H, W, k1d))

    out = jax.block_until_ready(blur_forward(x, big_op))

    k2d = jnp.asarray(np.outer(k1d, k1d).astype(np.float32))
    ref = jax.block_until_ready(reference_blur(x, k2d))

    assert out.shape == (N, C, H, W) and out.dtype == jnp.float32
    np.testing.assert_allclose(np.asarray(out), np.asarray(ref),
                               rtol=1e-4, atol=1e-4)
    print("KERNEL_OK")
</pallas_src>

<mosaic_0001>
module attributes {stable_mosaic.version = 11 : i64} {
  func.func @blur_kernel(%arg0: memref<6x256xf32, #tpu.memory_space<vmem>>, %arg1: memref<256x256xf32, #tpu.memory_space<vmem>>, %arg2: memref<6x256xf32, #tpu.memory_space<vmem>>) attributes {dimension_semantics = [], scalar_prefetch = 0 : i64, scratch_operands = 0 : i64, tpu.core_type = #tpu.core_type<tc>} {
    %c0 = arith.constant 0 : index
    %c0_0 = arith.constant 0 : index
    %0 = vector.load %arg0[%c0, %c0_0] : memref<6x256xf32, #tpu.memory_space<vmem>>, vector<6x256xf32>
    %c0_1 = arith.constant 0 : index
    %c0_2 = arith.constant 0 : index
    %1 = vector.load %arg1[%c0_1, %c0_2] : memref<256x256xf32, #tpu.memory_space<vmem>>, vector<256x256xf32>
    %cst = arith.constant dense<0.000000e+00> : vector<6x256xf32>
    %2 = tpu.matmul %0, %1, %cst {dimension_numbers = #tpu.dot_dimension_numbers<[1], [0], [0], [1], [0, 0, 1, 1], [], []>} : vector<6x256xf32>, vector<256x256xf32>, vector<6x256xf32> -> vector<6x256xf32>
    %c0_3 = arith.constant 0 : index
    %c0_4 = arith.constant 0 : index
    %3 = vector.load %arg2[%c0_3, %c0_4] : memref<6x256xf32, #tpu.memory_space<vmem>>, vector<6x256xf32>
    tpu.vector_store %arg2[%c0_3, %c0_4], %2 {strides = array<i32>} : memref<6x256xf32, #tpu.memory_space<vmem>>, vector<6x256xf32>,
    return
  }
}

</mosaic_0001>

<llo_original>
// kernel: tpu_custom_call.1
$region0: #{tpu_custom_call.1}
  #allocation0 [shape = 'u32[]', space=smem, size = 0x4, offset = 0x4, fixed_abs, tag = 'smem constant byte address 0x4 - core index']
  #allocation1 [shape = 'u32[144,128]{1,0:T(1,128)}', space=vmem, size = 0x12000, scoped, tag = 'internal scratch']
  %s0 = inlined_call_operand.hbm [shape: f32[6,256], index: 0, kind: input, shape index: {}]
  %s1 = inlined_call_operand.hbm [shape: f32[256,256], index: 1, kind: input, shape index: {}]
  %s2 = inlined_call_operand.hbm [shape: f32[6,256], index: 2, kind: output, shape index: {}]
  %s3 = sld [smem:[#allocation0]]
  $region26: #{tpu_custom_call.1} parent=0
    _
  %s5 = ssub.s32 1, %s3
  %s6 = scalar_select 0, %s5, %s3
  $region1: #{tpu_custom_call.1} parent=0
    #allocation2 [shape = 'u8[8192]{0}', space=vmem, size = 0x2000, scoped, tag = 'input window, operand 0, single buffered']
    #allocation3 [shape = 's32[1]{0}', space=sflag, size = 0x4, scoped, tag = 'scoped memory for tpu_custom_call.1']
    #allocation4 [shape = 's32[1]{0}', space=sflag, size = 0x4, scoped, tag = 'scoped memory for tpu_custom_call.1']
    #allocation5 [shape = 'u8[262144]{0}', space=vmem, size = 0x40000, scoped, tag = 'input window, operand 1, single buffered']
    #allocation6 [shape = 's32[1]{0}', space=sflag, size = 0x4, scoped, tag = 'scoped memory for tpu_custom_call.1']
    #allocation7 [shape = 'u8[8192]{0}', space=vmem, size = 0x2000, scoped, tag = 'output window, operand 0, single buffered']
    %7 = vsyncpa [#allocation3], 0
    %8 = vsyncpa [#allocation6], 0
    %9 = vsyncpa [#allocation4], 0
    // Predicated region
    $region2: #{tpu_custom_call.1} parent=1 // pred_check
      _
    $region3: #{tpu_custom_call.1} parent=1 // pred_check_branch
      %11 = sbr.rel (0) target = $region5
    $region4: #{tpu_custom_call.1} parent=1 // pred_region
      %s13 = ssub.s32 256, 256
      %14 = vsyncadd [#allocation3], %s13
      %s16 = sshll.u32 [#allocation2], 4
      %s17 = int_to_ptr.vmem [resolvable:$true] %s16
      %19 = dma.hbm_to_vmem [thread:$0]  %s0, 256, %s17, [#allocation3]
    $region5: #{tpu_custom_call.1} parent=1 // pred_fallthru
      _
    // Predicated region
    $region6: #{tpu_custom_call.1} parent=1 // pred_check
      _
    $region7: #{tpu_custom_call.1} parent=1 // pred_check_branch
      %21 = sbr.rel (0) target = $region9
    $region8: #{tpu_custom_call.1} parent=1 // pred_region
      %s23 = ssub.s32 8192, 8192
      %24 = vsyncadd [#allocation6], %s23
      %s25 = sshll.u32 [#allocation5], 4
      %s26 = int_to_ptr.vmem [resolvable:$true] %s25
      %31 = dma.hbm_to_vmem [thread:$0]  %s1, 8192, %s26, [#allocation6], 256, 256, 16
    $region9: #{tpu_custom_call.1} parent=1 // pred_fallthru
      _
    // Predicated region
    $region10: #{tpu_custom_call.1} parent=1 // pred_check
      _
    $region11: #{tpu_custom_call.1} parent=1 // pred_check_branch
      %33 = sbr.rel (0) target = $region13
    $region12: #{tpu_custom_call.1} parent=1 // pred_region
      %34 = dma.done [#allocation3], 256
    $region13: #{tpu_custom_call.1} parent=1 // pred_fallthru
      _
    // Predicated region
    $region14: #{tpu_custom_call.1} parent=1 // pred_check
      _
    $region15: #{tpu_custom_call.1} parent=1 // pred_check_branch
      %36 = sbr.rel (0) target = $region17
    $region16: #{tpu_custom_call.1} parent=1 // pred_region
      %37 = dma.done [#allocation6], 8192
    $region17: #{tpu_custom_call.1} parent=1 // pred_fallthru
      _
    %v38 = vld [vmem:[#allocation2] sm:$0x3f]
    %v39 = vld [vmem:[#allocation2 + $0x8] sm:$0x3f]
    %v40 = vld [vmem:[#allocation5] sm:$0xff]
    %v41 = vld [vmem:[#allocation5 + $0x8] sm:$0xff]
    %v42 = vld [vmem:[#allocation5 + $0x10] sm:$0xff]
    %v43 = vld [vmem:[#allocation5 + $0x18] sm:$0xff]
    %v44 = vld [vmem:[#allocation5 + $0x20] sm:$0xff]
    %v45 = vld [vmem:[#allocation5 + $0x28] sm:$0xff]
    %v46 = vld [vmem:[#allocation5 + $0x30] sm:$0xff]
    %v47 = vld [vmem:[#allocation5 + $0x38] sm:$0xff]
    %v48 = vld [vmem:[#allocation5 + $0x40] sm:$0xff]
    %v49 = vld [vmem:[#allocation5 + $0x48] sm:$0xff]
    %v50 = vld [vmem:[#allocation5 + $0x50] sm:$0xff]
    %v51 = vld [vmem:[#allocation5 + $0x58] sm:$0xff]
    %v52 = vld [vmem:[#allocation5 + $0x60] sm:$0xff]
    %v53 = vld [vmem:[#allocation5 + $0x68] sm:$0xff]
    %v54 = vld [vmem:[#allocation5 + $0x70] sm:$0xff]
    %v55 = vld [vmem:[#allocation5 + $0x78] sm:$0xff]
    %v56 = vld [vmem:[#allocation5 + $0x80] sm:$0xff]
    %v57 = vld [vmem:[#allocation5 + $0x88] sm:$0xff]
    %v58 = vld [vmem:[#allocation5 + $0x90] sm:$0xff]
    %v59 = vld [vmem:[#allocation5 + $0x98] sm:$0xff]
    %v60 = vld [vmem:[#allocation5 + $0xa0] sm:$0xff]
    %v61 = vld [vmem:[#allocation5 + $0xa8] sm:$0xff]
    %v62 = vld [vmem:[#allocation5 + $0xb0] sm:$0xff]
    %v63 = vld [vmem:[#allocation5 + $0xb8] sm:$0xff]
    %v64 = vld [vmem:[#allocation5 + $0xc0] sm:$0xff]
    %v65 = vld [vmem:[#allocation5 + $0xc8] sm:$0xff]
    %v66 = vld [vmem:[#allocation5 + $0xd0] sm:$0xff]
    %v67 = vld [vmem:[#allocation5 + $0xd8] sm:$0xff]
    %v68 = vld [vmem:[#allocation5 + $0xe0] sm:$0xff]
    %v69 = vld [vmem:[#allocation5 + $0xe8] sm:$0xff]
    %v70 = vld [vmem:[#allocation5 + $0xf0] sm:$0xff]
    %v71 = vld [vmem:[#allocation5 + $0xf8] sm:$0xff]
    %v72 = vld [vmem:[#allocation5 + $0x100] sm:$0xff]
    %v73 = vld [vmem:[#allocation5 + $0x108] sm:$0xff]
    %v74 = vld [vmem:[#allocation5 + $0x110] sm:$0xff]
    %v75 = vld [vmem:[#allocation5 + $0x118] sm:$0xff]
    %v76 = vld [vmem:[#allocation5 + $0x120] sm:$0xff]
    %v77 = vld [vmem:[#allocation5 + $0x128] sm:$0xff]
    %v78 = vld [vmem:[#allocation5 + $0x130] sm:$0xff]
    %v79 = vld [vmem:[#allocation5 + $0x138] sm:$0xff]
    %v80 = vld [vmem:[#allocation5 + $0x140] sm:$0xff]
    %v81 = vld [vmem:[#allocation5 + $0x148] sm:$0xff]
    %v82 = vld [vmem:[#allocation5 + $0x150] sm:$0xff]
    %v83 = vld [vmem:[#allocation5 + $0x158] sm:$0xff]
    %v84 = vld [vmem:[#allocation5 + $0x160] sm:$0xff]
    %v85 = vld [vmem:[#allocation5 + $0x168] sm:$0xff]
    %v86 = vld [vmem:[#allocation5 + $0x170] sm:$0xff]
    %v87 = vld [vmem:[#allocation5 + $0x178] sm:$0xff]
    %v88 = vld [vmem:[#allocation5 + $0x180] sm:$0xff]
    %v89 = vld [vmem:[#allocation5 + $0x188] sm:$0xff]
    %v90 = vld [vmem:[#allocation5 + $0x190] sm:$0xff]
    %v91 = vld [vmem:[#allocation5 + $0x198] sm:$0xff]
    %v92 = vld [vmem:[#allocation5 + $0x1a0] sm:$0xff]
    %v93 = vld [vmem:[#allocation5 + $0x1a8] sm:$0xff]
    %v94 = vld [vmem:[#allocation5 + $0x1b0] sm:$0xff]
    %v95 = vld [vmem:[#allocation5 + $0x1b8] sm:$0xff]
    %v96 = vld [vmem:[#allocation5 + $0x1c0] sm:$0xff]
    %v97 = vld [vmem:[#allocation5 + $0x1c8] sm:$0xff]
    %v98 = vld [vmem:[#allocation5 + $0x1d0] sm:$0xff]
    %v99 = vld [vmem:[#allocation5 + $0x1d8] sm:$0xff]
    %v100 = vld [vmem:[#allocation5 + $0x1e0] sm:$0xff]
    %v101 = vld [vmem:[#allocation5 + $0x1e8] sm:$0xff]
    %v102 = vld [vmem:[#allocation5 + $0x1f0] sm:$0xff]
    %v103 = vld [vmem:[#allocation5 + $0x1f8] sm:$0xff]
    %104 = vmatprep.subr.mxu0 %v71
    %105 = vmatpush1.msra.mxu0 %v70
    %106 = vmatprep.subr.mxu0 %v69
    %107 = vmatpush1.msra.mxu0 %v68
    %108 = vmatprep.subr.mxu0 %v67
    %109 = vmatpush1.msra.mxu0 %v66
    %110 = vmatprep.subr.mxu0 %v65
    %111 = vmatpush1.msra.mxu0 %v64
    %112 = vmatprep.subr.mxu0 %v63
    %113 = vmatpush1.msra.mxu0 %v62
    %114 = vmatprep.subr.mxu0 %v61
    %115 = vmatpush1.msra.mxu0 %v60
    %116 = vmatprep.subr.mxu0 %v59
    %117 = vmatpush1.msra.mxu0 %v58
    %118 = vmatprep.subr.mxu0 %v57
    %119 = vmatpush1.msra.mxu0 %v56
    %120 = vmatprep.subr.mxu0 %v55
    %121 = vmatpush1.msra.mxu0 %v54
    %122 = vmatprep.subr.mxu0 %v53
    %123 = vmatpush1.msra.mxu0 %v52
    %124 = vmatprep.subr.mxu0 %v51
    %125 = vmatpush1.msra.mxu0 %v50
    %126 = vmatprep.subr.mxu0 %v49
    %127 = vmatpush1.msra.mxu0 %v48
    %128 = vmatprep.subr.mxu0 %v47
    %129 = vmatpush1.msra.mxu0 %v46
    %130 = vmatprep.subr.mxu0 %v45
    %131 = vmatpush1.msra.mxu0 %v44
    %132 = vmatprep.subr.mxu0 %v43
    %133 = vmatpush1.msra.mxu0 %v42
    %134 = vmatprep.subr.mxu0 %v41
    %135 = vmatpush1.msra.mxu0 %v40
    %136 = vmatprep.subr.mxu0 %v103
    %137 = vmatpush2.msra.mxu0 %v102
    %138 = vmatprep.subr.mxu0 %v101
    %139 = vmatpush2.msra.mxu0 %v100
    %140 = vmatprep.subr.mxu0 %v99
    %141 = vmatpush2.msra.mxu0 %v98
    %142 = vmatprep.subr.mxu0 %v97
    %143 = vmatpush2.msra.mxu0 %v96
    %144 = vmatprep.subr.mxu0 %v95
    %145 = vmatpush2.msra.mxu0 %v94
    %146 = vmatprep.subr.mxu0 %v93
    %147 = vmatpush2.msra.mxu0 %v92
    %148 = vmatprep.subr.mxu0 %v91
    %149 = vmatpush2.msra.mxu0 %v90
    %150 = vmatprep.subr.mxu0 %v89
    %151 = vmatpush2.msra.mxu0 %v88
    %152 = vmatprep.subr.mxu0 %v87
    %153 = vmatpush2.msra.mxu0 %v86
    %154 = vmatprep.subr.mxu0 %v85
    %155 = vmatpush2.msra.mxu0 %v84
    %156 = vmatprep.subr.mxu0 %v83
    %157 = vmatpush2.msra.mxu0 %v82
    %158 = vmatprep.subr.mxu0 %v81
    %159 = vmatpush2.msra.mxu0 %v80
    %160 = vmatprep.subr.mxu0 %v79
    %161 = vmatpush2.msra.mxu0 %v78
    %162 = vmatprep.subr.mxu0 %v77
    %163 = vmatpush2.msra.mxu0 %v76
    %164 = vmatprep.subr.mxu0 %v75
    %165 = vmatpush2.msra.mxu0 %v74
    %166 = vmatprep.subr.mxu0 %v73
    %167 = vmatpush2.msra.mxu0 %v72
    %168 = vmatprep.mubr.f32.mxu0 %v39
    %169 = vmatmul.mubr.f32.gmra.mxu0 %v38
    %v170 = vpop.f32.mrf.mxu0
    %v171 = vadd.f32 0.0, %v170
    %v172 = vpop.f32.mrf.mxu0
    %v173 = vadd.f32 0.0, %v172
    %174 = vdwg.mxu0
    %175 = vst [vmem:[#allocation7] sm:$0x3f] %v171
    %176 = vst [vmem:[#allocation7 + $0x8] sm:$0x3f] %v173
    // Predicated region
    $region18: #{tpu_custom_call.1} parent=1 // pred_check
      _
    $region19: #{tpu_custom_call.1} parent=1 // pred_check_branch
      %178 = sbr.rel (0) target = $region21
    $region20: #{tpu_custom_call.1} parent=1 // pred_region
      %s180 = ssub.s32 256, 256
      %181 = vsyncadd [#allocation4], %s180
      %s183 = sshll.u32 [#allocation7], 4
      %s184 = int_to_ptr.vmem [resolvable:$true] %s183
      %186 = dma.vmem_to_hbm [thread:$0]  %s184, 256, %s2, [#allocation4]
    $region21: #{tpu_custom_call.1} parent=1 // pred_fallthru
      _
    // Predicated region
    $region22: #{tpu_custom_call.1} parent=1 // pred_check
      _
    $region23: #{tpu_custom_call.1} parent=1 // pred_check_branch
      %188 = sbr.rel (0) target = $region25
    $region24: #{tpu_custom_call.1} parent=1 // pred_region
      %189 = dma.done [#allocation4], 256
    $region25: #{tpu_custom_call.1} parent=1 // pred_fallthru
      _
    %190 = vsyncpa [#allocation3], 1
    %191 = vsyncpa [#allocation6], 1
    %192 = vsyncpa [#allocation4], 1

</llo_original>
